<compile_context>
chip_gen: v7x
topology: tpu7x:2x2x1
jax: 0.10.0
libtpu: 0.0.40
codegen_flags: <defaults>
</compile_context>

<pallas_src>
import math
import numpy as np
import jax
import jax.numpy as jnp
from jax.experimental import pallas as pl
from jax.experimental.pallas import tpu as pltpu

EMBED_DIM = 128
NEG = -1e30
TILE = 128                       # node-axis tile (lane-dense)
VMEM_LIMIT = 32 * 1024 * 1024    # explicit scoped-VMEM budget (fits v7x too)


def _vmem():
    return pl.BlockSpec(memory_space=pltpu.MemorySpace.VMEM)


def _pad_lane(n):
    return max(TILE, ((n + TILE - 1) // TILE) * TILE)


# ----------------------------- Pallas kernels -----------------------------

def _msg_kernel(x_ref, w_ref, b_ref, o_ref):
    """SAGE message: relu(lin(x)) for one node tile."""
    o_ref[...] = jnp.maximum(
        jnp.dot(x_ref[...], w_ref[...], preferred_element_type=jnp.float32)
        + b_ref[...], 0.0)


def msg_pallas(xp, lin_w, lin_b):
    Np, Cin = xp.shape
    Cout = lin_w.shape[1]
    return pl.pallas_call(
        _msg_kernel,
        out_shape=jax.ShapeDtypeStruct((Np, Cout), jnp.float32),
        grid_spec=pltpu.PrefetchScalarGridSpec(
            num_scalar_prefetch=0,
            grid=(Np // TILE,),
            in_specs=[pl.BlockSpec((TILE, Cin), lambda i: (i, 0)),
                      pl.BlockSpec((Cin, Cout), lambda i: (0, 0)),
                      pl.BlockSpec((1, Cout), lambda i: (0, 0))],
            out_specs=pl.BlockSpec((TILE, Cout), lambda i: (i, 0))),
        compiler_params=pltpu.CompilerParams(
            dimension_semantics=("parallel",),
            vmem_limit_bytes=VMEM_LIMIT),
    )(xp, lin_w, lin_b)


def _sage_aggr_kernel(occ_ref, bias_ref, msg_ref, x_ref, waggr_ref, wroot_ref,
                      poolw_ref, gated_ref, score_ref, acc_ref):
    """Tiled max-aggregation (additive-bias mask, rank-1 running max) with the
    SAGE update and the TopKPooling gate fused into the epilogue."""
    i = pl.program_id(0)
    j = pl.program_id(1)
    n_j = pl.num_programs(1)

    @pl.when(j == 0)
    def _():
        acc_ref[...] = jnp.full_like(acc_ref, NEG)

    # Skip source tiles with no edges into this target tile (scalar prefetch).
    @pl.when(occ_ref[i * n_j + j] > 0)
    def _():
        # acc[t, c] = max(acc[t, c], bias[t, s] + msg[j*TILE + s, c])
        # Static unroll over source rows; all ops are 2-D (TILE, Cout) —
        # no (TILE, TILE, Cout) broadcast, no VMEM spill.
        bias = bias_ref[...].astype(jnp.float32)          # (TILE, TILE)
        acc = acc_ref[...]
        base = pl.multiple_of(j * TILE, TILE)
        for s in range(TILE):
            col = bias[:, s:s + 1]                        # (TILE, 1)
            row = msg_ref[pl.ds(base + s, 1), :]          # (1, Cout) resident
            acc = jnp.maximum(acc, col + row)
        acc_ref[...] = acc

    @pl.when(j == n_j - 1)
    def _():
        # update: relu(aggr @ W_aggr + x @ W_root)  (concat removed)
        out = jnp.maximum(
            jnp.dot(acc_ref[...], waggr_ref[...],
                    preferred_element_type=jnp.float32)
            + jnp.dot(x_ref[...], wroot_ref[...],
                      preferred_element_type=jnp.float32),
            0.0)
        # fused TopKPooling gate; pool_w already scaled by 1/||w|| on host
        score = jnp.dot(out, poolw_ref[...],
                        preferred_element_type=jnp.float32)
        score_ref[...] = score
        gated_ref[...] = out * jnp.tanh(score)


def sage_aggr_pallas(occ, bias, msg, xp, w_aggr, w_root, pool_w):
    Np, Cin = xp.shape
    Cout = msg.shape[1]
    nT = Np // TILE
    return pl.pallas_call(
        _sage_aggr_kernel,
        out_shape=(jax.ShapeDtypeStruct((Np, Cin), jnp.float32),
                   jax.ShapeDtypeStruct((Np, 1), jnp.float32)),
        grid_spec=pltpu.PrefetchScalarGridSpec(
            num_scalar_prefetch=1,
            grid=(nT, nT),
            in_specs=[
                pl.BlockSpec((TILE, TILE), lambda i, j, o: (i, j)),  # bias bf16
                pl.BlockSpec((Np, Cout), lambda i, j, o: (0, 0)),    # msg resident
                pl.BlockSpec((TILE, Cin), lambda i, j, o: (i, 0)),   # x tile
                pl.BlockSpec((Cout, Cin), lambda i, j, o: (0, 0)),   # W_aggr
                pl.BlockSpec((Cin, Cin), lambda i, j, o: (0, 0)),    # W_root
                pl.BlockSpec((Cin, 1), lambda i, j, o: (0, 0)),      # pool_w
            ],
            out_specs=[pl.BlockSpec((TILE, Cin), lambda i, j, o: (i, 0)),
                       pl.BlockSpec((TILE, 1), lambda i, j, o: (i, 0))],
            scratch_shapes=[pltpu.VMEM((TILE, Cout), jnp.float32)]),
        compiler_params=pltpu.CompilerParams(
            dimension_semantics=("parallel", "arbitrary"),
            vmem_limit_bytes=VMEM_LIMIT),
    )(occ, bias, msg, xp, w_aggr, w_root, pool_w)


def _readout_kernel(x_ref, mt_ref, inv_ref, gmp_ref, gap_ref, max_acc, sum_acc):
    """global_max_pool / global_mean_pool, tiled over node tiles.
    Transposed mask (nodes on sublanes) + per-graph 2-D selects: no 3-D
    broadcast intermediate regardless of batch size."""
    t = pl.program_id(0)
    B = mt_ref.shape[1]

    @pl.when(t == 0)
    def _():
        max_acc[...] = jnp.full_like(max_acc, NEG)
        sum_acc[...] = jnp.zeros_like(sum_acc)

    x = x_ref[...]                   # (TILE, C)
    mt = mt_ref[...]                 # (TILE, B)   0/1 membership, transposed
    for g in range(B):               # B is small & static
        m = mt[:, g:g + 1]           # (TILE, 1)
        max_acc[g, :] = jnp.maximum(
            max_acc[g, :], jnp.max(jnp.where(m > 0, x, NEG), axis=0))
        sum_acc[g, :] = sum_acc[g, :] + jnp.sum(jnp.where(m > 0, x, 0.0), axis=0)

    @pl.when(t == pl.num_programs(0) - 1)
    def _():
        gmp_ref[...] = max_acc[...]
        gap_ref[...] = sum_acc[...] * inv_ref[...]


def readout_pallas(xp, maskT, inv_cnt):
    Np, C = xp.shape
    B = maskT.shape[1]
    return pl.pallas_call(
        _readout_kernel,
        out_shape=(jax.ShapeDtypeStruct((B, C), jnp.float32),
                   jax.ShapeDtypeStruct((B, C), jnp.float32)),
        grid_spec=pltpu.PrefetchScalarGridSpec(
            num_scalar_prefetch=0,
            grid=(Np // TILE,),
            in_specs=[pl.BlockSpec((TILE, C), lambda t: (t, 0)),
                      pl.BlockSpec((TILE, B), lambda t: (t, 0)),
                      pl.BlockSpec((B, 1), lambda t: (0, 0))],
            out_specs=[pl.BlockSpec((B, C), lambda t: (0, 0)),
                       pl.BlockSpec((B, C), lambda t: (0, 0))],
            scratch_shapes=[pltpu.VMEM((B, C), jnp.float32),
                            pltpu.VMEM((B, C), jnp.float32)]),
        compiler_params=pltpu.CompilerParams(
            dimension_semantics=("arbitrary",),
            vmem_limit_bytes=VMEM_LIMIT),
    )(xp, maskT, inv_cnt)


def _head_kernel(x_ref, w1_ref, b1_ref, w2_ref, b2_ref, w3_ref, b3_ref, o_ref):
    """lin1 -> (folded bn1) -> relu -> lin2 -> (folded bn2) -> relu -> lin3 -> sigmoid."""
    # TODO(synk): F.dropout(p=0.5) omitted (eval-mode identity).
    h = jnp.maximum(
        jnp.dot(x_ref[...], w1_ref[...], preferred_element_type=jnp.float32)
        + b1_ref[...], 0.0)
    h = jnp.maximum(
        jnp.dot(h, w2_ref[...], preferred_element_type=jnp.float32)
        + b2_ref[...], 0.0)
    h = jnp.dot(h, w3_ref[...], preferred_element_type=jnp.float32) + b3_ref[...]
    o_ref[...] = 1.0 / (1.0 + jnp.exp(-h))


def head_pallas(x, p):
    B = x.shape[0]
    args = (x, p['w1'], p['b1'], p['w2'], p['b2'], p['w3'], p['b3'])
    return pl.pallas_call(
        _head_kernel,
        out_shape=jax.ShapeDtypeStruct((B, 1), jnp.float32),
        in_specs=[_vmem()] * len(args),
        out_specs=_vmem(),
        compiler_params=pltpu.CompilerParams(vmem_limit_bytes=VMEM_LIMIT),
    )(*args)


# ------------------------------ host glue ---------------------------------

def sage_conv_gate(x, edge_index, conv_p, pool_w_norm):
    """remove_self_loops + add_self_loops -> device-built additive-bias (bf16)
    adjacency, then Pallas message + tiled aggregation/update with fused
    TopK gate and sparse-tile skipping via scalar prefetch."""
    N, Cin = x.shape
    Np = _pad_lane(N)
    nT = Np // TILE
    src = np.asarray(edge_index[0], dtype=np.int64)
    dst = np.asarray(edge_index[1], dtype=np.int64)

    # additive-bias adjacency built on device: 0 where edge s->t, -1e30 else;
    # full diagonal = 0 (add_self_loops + self-loops for padded rows).
    bias = jnp.full((Np, Np), NEG, jnp.bfloat16)
    if src.size:
        bias = bias.at[jnp.asarray(dst, jnp.int32),
                       jnp.asarray(src, jnp.int32)].set(0.0)
    diag = jnp.arange(Np, dtype=jnp.int32)
    bias = bias.at[diag, diag].set(0.0)

    # tiny host-side tile-occupancy table (diagonal tiles always occupied)
    occ = np.zeros((nT, nT), np.int32)
    if src.size:
        occ[dst // TILE, src // TILE] = 1
    occ[np.arange(nT), np.arange(nT)] = 1
    occ = occ.reshape(-1)

    xp = jnp.zeros((Np, Cin), jnp.float32).at[:N].set(x)
    msg = msg_pallas(xp, conv_p['lin_w'], conv_p['lin_b'])
    gated, score = sage_aggr_pallas(jnp.asarray(occ), bias, msg, xp,
                                    conv_p['upd_w_aggr'], conv_p['upd_w_root'],
                                    pool_w_norm)
    return gated, score, N


def topk_select(gated_dev, score_dev, N, edge_index, batch, ratio=0.8):
    # TODO(synk): per-graph top-k node selection and edge filtering/remapping
    # produce data-dependent shapes; kept on host.  Only the (N,) score is
    # pulled to host — the gated feature matrix stays resident on device.
    score_np = np.asarray(jax.device_get(score_dev))[:N, 0]
    perm_parts = []
    for g in np.unique(batch):
        idx = np.where(batch == g)[0]
        k = int(math.ceil(ratio * idx.shape[0]))
        order = idx[np.argsort(-score_np[idx], kind='stable')][:k]
        perm_parts.append(order)
    perm = np.concatenate(perm_parts)
    new_x = jnp.take(gated_dev, jnp.asarray(perm, jnp.int32), axis=0)
    new_batch = batch[perm]
    remap = -np.ones(N, dtype=np.int64)
    remap[perm] = np.arange(perm.shape[0])
    src, dst = edge_index[0], edge_index[1]
    keep = (remap[src] >= 0) & (remap[dst] >= 0)
    new_ei = np.stack([remap[src[keep]], remap[dst[keep]]]).astype(np.int64)
    return new_x, new_ei, new_batch


def readout(x_dev, batch, num_graphs):
    """torch.cat([gmp(x, batch), gap(x, batch)], dim=1)"""
    N, C = x_dev.shape
    Np = _pad_lane(N)
    xp = jnp.zeros((Np, C), jnp.float32).at[:N].set(x_dev)
    maskT = np.zeros((Np, num_graphs), np.float32)      # nodes on sublanes
    maskT[np.arange(N), batch] = 1.0
    cnt = np.maximum(np.bincount(batch, minlength=num_graphs), 1).astype(np.float32)
    inv = (1.0 / cnt).reshape(num_graphs, 1).astype(np.float32)
    gmp, gap = readout_pallas(xp, jnp.asarray(maskT), jnp.asarray(inv))
    return jnp.concatenate([gmp, gap], axis=1)


def fold_head(p, eps=1e-5):
    """Fold eval-mode BatchNorm1d into the adjacent Linear weights/biases."""
    s1 = p['g1'] / jnp.sqrt(p['rv1'] + eps)
    s2 = p['g2'] / jnp.sqrt(p['rv2'] + eps)
    return {
        'w1': p['w1'] * s1, 'b1': (p['b1'] - p['rm1']) * s1 + p['be1'],
        'w2': p['w2'] * s2, 'b2': (p['b2'] - p['rm2']) * s2 + p['be2'],
        'w3': p['w3'], 'b3': p['b3'],
    }


def init_params(key):
    keys = iter(jax.random.split(key, 48))

    def nrm(shape, scale=0.1):
        return (scale * jax.random.normal(next(keys), shape)).astype(jnp.float32)

    params = {'emb': nrm((300, EMBED_DIM))}
    for name in ('conv1', 'conv2', 'conv3'):
        params[name] = {
            'lin_w': nrm((128, 128)),       # Linear(128, 128) weight, (in, out)
            'lin_b': nrm((1, 128)),
            'upd_w_aggr': nrm((128, 128)),  # update_lin rows for aggr_out
            'upd_w_root': nrm((128, 128)),  # update_lin rows for x
        }
    for name in ('pool1', 'pool2', 'pool3'):
        params[name] = nrm((128,))          # TopKPooling projection vector
    params['head'] = {
        'w1': nrm((256, 128)), 'b1': nrm((1, 128)),
        'g1': jnp.ones((1, 128), jnp.float32), 'be1': jnp.zeros((1, 128), jnp.float32),
        'rm1': jnp.zeros((1, 128), jnp.float32), 'rv1': jnp.ones((1, 128), jnp.float32),
        'w2': nrm((128, 64)), 'b2': nrm((1, 64)),
        'g2': jnp.ones((1, 64), jnp.float32), 'be2': jnp.zeros((1, 64), jnp.float32),
        'rm2': jnp.zeros((1, 64), jnp.float32), 'rv2': jnp.ones((1, 64), jnp.float32),
        'w3': nrm((64, 1)), 'b3': nrm((1, 1)),
    }
    return params


def net_forward(params, x_ids, edge_index, batch):
    num_graphs = int(batch.max()) + 1
    # embedding lookup (gather glue)
    x = jnp.take(params['emb'], jnp.asarray(x_ids, dtype=jnp.int32), axis=0)

    reads = []
    ei, b = edge_index, batch
    for conv_name, pool_name in (('conv1', 'pool1'), ('conv2', 'pool2'),
                                 ('conv3', 'pool3')):
        w = params[pool_name]
        pool_w_norm = (w / jnp.sqrt(jnp.sum(w * w))).reshape(-1, 1)
        gated, score, N = sage_conv_gate(x, ei, params[conv_name], pool_w_norm)
        x, ei, b = topk_select(gated, score, N, ei, b)
        reads.append(readout(x, b, num_graphs))

    h = reads[0] + reads[1] + reads[2]               # (B, 256)
    out = head_pallas(h, fold_head(params['head']))  # (B, 1)
    return out[:, 0]                                 # squeeze(1)


if __name__ == "__main__":
    key = jax.random.PRNGKey(0)
    params = init_params(key)

    # 2 graphs in the batch: 6 nodes + 5 nodes
    x_ids = np.array([3, 17, 42, 7, 99, 123, 5, 250, 13, 64, 200], dtype=np.int32)
    batch = np.array([0] * 6 + [1] * 5, dtype=np.int64)
    edges = [(0, 1), (1, 2), (2, 3), (3, 4), (4, 5), (1, 0), (2, 1), (0, 0),
             (6, 7), (7, 8), (8, 9), (9, 10), (10, 6)]
    edge_index = np.array(edges, dtype=np.int64).T   # (2, 13)

    out = net_forward(params, x_ids, edge_index, batch)
    out = jax.block_until_ready(out)
    assert out.shape == (2,)
    assert bool(jnp.all(jnp.isfinite(out)))
    print("KERNEL_OK")
</pallas_src>

<mosaic_0001>
module attributes {stable_mosaic.version = 11 : i64} {
  func.func @_msg_kernel(%arg0: i32, %arg1: memref<128x128xf32, #tpu.memory_space<vmem>>, %arg2: memref<128x128xf32, #tpu.memory_space<vmem>>, %arg3: memref<1x128xf32, #tpu.memory_space<vmem>>, %arg4: memref<128x128xf32, #tpu.memory_space<vmem>>) attributes {dimension_semantics = [#tpu.dimension_semantics<parallel>], iteration_bounds = array<i64: 1>, scalar_prefetch = 0 : i64, scratch_operands = 0 : i64, tpu.core_type = #tpu.core_type<tc>, window_params = [{transform_indices = @transform_0, window_bounds = array<i64: 128, 128>}, {pipeline_mode = #tpu.pipeline_mode<synchronous>, transform_indices = @transform_1, window_bounds = array<i64: 128, 128>}, {pipeline_mode = #tpu.pipeline_mode<synchronous>, transform_indices = @transform_2, window_bounds = array<i64: 1, 128>}, {transform_indices = @transform_3, window_bounds = array<i64: 128, 128>}]} {
    %c0 = arith.constant 0 : index
    %c0_0 = arith.constant 0 : index
    %0 = vector.load %arg1[%c0, %c0_0] : memref<128x128xf32, #tpu.memory_space<vmem>>, vector<128x128xf32>
    %c0_1 = arith.constant 0 : index
    %c0_2 = arith.constant 0 : index
    %1 = vector.load %arg2[%c0_1, %c0_2] : memref<128x128xf32, #tpu.memory_space<vmem>>, vector<128x128xf32>
    %cst = arith.constant dense<0.000000e+00> : vector<128x128xf32>
    %2 = tpu.matmul %0, %1, %cst {dimension_numbers = #tpu.dot_dimension_numbers<[1], [0], [0], [1], [0, 0, 1, 1], [], []>} : vector<128x128xf32>, vector<128x128xf32>, vector<128x128xf32> -> vector<128x128xf32>
    %c0_3 = arith.constant 0 : index
    %c0_4 = arith.constant 0 : index
    %3 = vector.load %arg3[%c0_3, %c0_4] : memref<1x128xf32, #tpu.memory_space<vmem>>, vector<1x128xf32>
    %4 = vector.broadcast %3 : vector<1x128xf32> to vector<128x128xf32>
    %5 = arith.addf %2, %4 : vector<128x128xf32>
    %cst_5 = arith.constant 0.000000e+00 : f32
    %6 = vector.broadcast %cst_5 : f32 to vector<128x128xf32>
    %7 = arith.maximumf %5, %6 : vector<128x128xf32>
    %c0_6 = arith.constant 0 : index
    %c0_7 = arith.constant 0 : index
    %8 = vector.load %arg4[%c0_6, %c0_7] : memref<128x128xf32, #tpu.memory_space<vmem>>, vector<128x128xf32>
    tpu.vector_store %arg4[%c0_6, %c0_7], %7 {strides = array<i32>} : memref<128x128xf32, #tpu.memory_space<vmem>>, vector<128x128xf32>,
    return
  }
  func.func @transform_0(%arg0: i32) -> (i32, i32) {
    %c0_i32 = arith.constant 0 : i32
    %c0_i32_0 = arith.constant 0 : i32
    return %arg0, %c0_i32 : i32, i32
  }
  func.func @transform_1(%arg0: i32) -> (i32, i32) {
    %c0_i32 = arith.constant 0 : i32
    %c0_i32_0 = arith.constant 0 : i32
    %c0_i32_1 = arith.constant 0 : i32
    return %c0_i32, %c0_i32_0 : i32, i32
  }
  func.func @transform_2(%arg0: i32) -> (i32, i32) {
    %c0_i32 = arith.constant 0 : i32
    %c0_i32_0 = arith.constant 0 : i32
    %c0_i32_1 = arith.constant 0 : i32
    return %c0_i32, %c0_i32_0 : i32, i32
  }
  func.func @transform_3(%arg0: i32) -> (i32, i32) {
    %c0_i32 = arith.constant 0 : i32
    %c0_i32_0 = arith.constant 0 : i32
    return %arg0, %c0_i32 : i32, i32
  }
}

</mosaic_0001>

<llo_original>
// kernel: tpu_custom_call.1
$region0: #{tpu_custom_call.1}
  #allocation0 [shape = 'u32[]', space=smem, size = 0x4, offset = 0x4, fixed_abs, tag = 'smem constant byte address 0x4 - core index']
  #allocation1 [shape = 'u32[144,128]{1,0:T(1,128)}', space=vmem, size = 0x12000, scoped, tag = 'internal scratch']
  %s0 = inlined_call_operand.hbm [shape: f32[128,128], index: 0, kind: input, shape index: {}]
  %s1 = inlined_call_operand.hbm [shape: f32[128,128], index: 1, kind: input, shape index: {}]
  %s2 = inlined_call_operand.vmem [shape: f32[1,128], index: 2, kind: input, shape index: {}]
  %s3 = inlined_call_operand.hbm [shape: f32[128,128], index: 3, kind: output, shape index: {}]
  %s4 = sld [smem:[#allocation0]]
  $region30: #{tpu_custom_call.1} parent=0
    _
  %s6 = ssub.s32 1, %s4
  %s7 = scalar_select 0, %s6, %s4
  $region1: #{tpu_custom_call.1} parent=0
    #allocation2 [shape = 'u8[65536]{0}', space=vmem, size = 0x10000, scoped, tag = 'input window, operand 0, single buffered']
    #allocation3 [shape = 's32[1]{0}', space=sflag, size = 0x4, scoped, tag = 'scoped memory for tpu_custom_call.1']
    #allocation4 [shape = 's32[1]{0}', space=sflag, size = 0x4, scoped, tag = 'scoped memory for tpu_custom_call.1']
    #allocation5 [shape = 'u8[65536]{0}', space=vmem, size = 0x10000, scoped, tag = 'input window, operand 1, single buffered']
    #allocation6 [shape = 's32[1]{0}', space=sflag, size = 0x4, scoped, tag = 'scoped memory for tpu_custom_call.1']
    #allocation7 [shape = 'u8[65536]{0}', space=vmem, size = 0x10000, scoped, tag = 'output window, operand 0, single buffered']
    %8 = vsyncpa [#allocation3], 0
    %9 = vsyncpa [#allocation6], 0
    %10 = vsyncpa [#allocation4], 0
    // Predicated region
    $region2: #{tpu_custom_call.1} parent=1 // pred_check
      _
    $region3: #{tpu_custom_call.1} parent=1 // pred_check_branch
      %12 = sbr.rel (0) target = $region5
    $region4: #{tpu_custom_call.1} parent=1 // pred_region
      %s14 = ssub.s32 2048, 2048
      %15 = vsyncadd [#allocation3], %s14
      %s16 = sshll.u32 [#allocation2], 4
      %s17 = int_to_ptr.vmem [resolvable:$true] %s16
      %22 = dma.hbm_to_vmem [thread:$0]  %s0, 2048, %s17, [#allocation3], 128, 128, 8
    $region5: #{tpu_custom_call.1} parent=1 // pred_fallthru
      _
    // Predicated region
    $region6: #{tpu_custom_call.1} parent=1 // pred_check
      _
    $region7: #{tpu_custom_call.1} parent=1 // pred_check_branch
      %24 = sbr.rel (0) target = $region9
    $region8: #{tpu_custom_call.1} parent=1 // pred_region
      %s26 = ssub.s32 2048, 2048
      %27 = vsyncadd [#allocation6], %s26
      %s28 = sshll.u32 [#allocation5], 4
      %s29 = int_to_ptr.vmem [resolvable:$true] %s28
      %34 = dma.hbm_to_vmem [thread:$0]  %s1, 2048, %s29, [#allocation6], 128, 128, 8
    $region9: #{tpu_custom_call.1} parent=1 // pred_fallthru
      _
    // Predicated region
    $region10: #{tpu_custom_call.1} parent=1 // pred_check
      _
    $region11: #{tpu_custom_call.1} parent=1 // pred_check_branch
      %36 = sbr.rel (0) target = $region13
    $region12: #{tpu_custom_call.1} parent=1 // pred_region
      _
    $region13: #{tpu_custom_call.1} parent=1 // pred_fallthru
      _
    // Predicated region
    $region14: #{tpu_custom_call.1} parent=1 // pred_check
      _
    $region15: #{tpu_custom_call.1} parent=1 // pred_check_branch
      %38 = sbr.rel (0) target = $region17
    $region16: #{tpu_custom_call.1} parent=1 // pred_region
      %39 = dma.done [#allocation3], 2048
    $region17: #{tpu_custom_call.1} parent=1 // pred_fallthru
      _
    // Predicated region
    $region18: #{tpu_custom_call.1} parent=1 // pred_check
      _
    $region19: #{tpu_custom_call.1} parent=1 // pred_check_branch
      %41 = sbr.rel (0) target = $region21
    $region20: #{tpu_custom_call.1} parent=1 // pred_region
      %42 = dma.done [#allocation6], 2048
    $region21: #{tpu_custom_call.1} parent=1 // pred_fallthru
      _
    %v43 = vld [vmem:[#allocation2] sm:$0xff]
    %v44 = vld [vmem:[#allocation2 + $0x8] sm:$0xff]
    %v45 = vld [vmem:[#allocation2 + $0x10] sm:$0xff]
    %v46 = vld [vmem:[#allocation2 + $0x18] sm:$0xff]
    %v47 = vld [vmem:[#allocation2 + $0x20] sm:$0xff]
    %v48 = vld [vmem:[#allocation2 + $0x28] sm:$0xff]
    %v49 = vld [vmem:[#allocation2 + $0x30] sm:$0xff]
    %v50 = vld [vmem:[#allocation2 + $0x38] sm:$0xff]
    %v51 = vld [vmem:[#allocation2 + $0x40] sm:$0xff]
    %v52 = vld [vmem:[#allocation2 + $0x48] sm:$0xff]
    %v53 = vld [vmem:[#allocation2 + $0x50] sm:$0xff]
    %v54 = vld [vmem:[#allocation2 + $0x58] sm:$0xff]
    %v55 = vld [vmem:[#allocation2 + $0x60] sm:$0xff]
    %v56 = vld [vmem:[#allocation2 + $0x68] sm:$0xff]
    %v57 = vld [vmem:[#allocation2 + $0x70] sm:$0xff]
    %v58 = vld [vmem:[#allocation2 + $0x78] sm:$0xff]
    %v59 = vld [vmem:[#allocation5] sm:$0xff]
    %v60 = vld [vmem:[#allocation5 + $0x8] sm:$0xff]
    %v61 = vld [vmem:[#allocation5 + $0x10] sm:$0xff]
    %v62 = vld [vmem:[#allocation5 + $0x18] sm:$0xff]
    %v63 = vld [vmem:[#allocation5 + $0x20] sm:$0xff]
    %v64 = vld [vmem:[#allocation5 + $0x28] sm:$0xff]
    %v65 = vld [vmem:[#allocation5 + $0x30] sm:$0xff]
    %v66 = vld [vmem:[#allocation5 + $0x38] sm:$0xff]
    %v67 = vld [vmem:[#allocation5 + $0x40] sm:$0xff]
    %v68 = vld [vmem:[#allocation5 + $0x48] sm:$0xff]
    %v69 = vld [vmem:[#allocation5 + $0x50] sm:$0xff]
    %v70 = vld [vmem:[#allocation5 + $0x58] sm:$0xff]
    %v71 = vld [vmem:[#allocation5 + $0x60] sm:$0xff]
    %v72 = vld [vmem:[#allocation5 + $0x68] sm:$0xff]
    %v73 = vld [vmem:[#allocation5 + $0x70] sm:$0xff]
    %v74 = vld [vmem:[#allocation5 + $0x78] sm:$0xff]
    %v75 = vld [vmem:[%s2] sm:$0x1]
    %v77 = vlaneseq
    %v78 = vshrl.u32 %v77, 7
    %v79 = vsub.s32 0, %v78
    %v80 = vrot.slane %v75, %v79
    %82 = vmatprep.subr.mxu0 0.0
    %83 = vmatpush1.msra.mxu0 %v59
    %84 = vmatprep.subr.mxu0 0.0
    %85 = vmatpush1.msra.mxu0 %v60
    %86 = vmatprep.subr.mxu0 0.0
    %87 = vmatpush1.msra.mxu0 %v61
    %88 = vmatprep.subr.mxu0 0.0
    %89 = vmatpush1.msra.mxu0 %v62
    %90 = vmatprep.subr.mxu0 0.0
    %91 = vmatpush1.msra.mxu0 %v63
    %92 = vmatprep.subr.mxu0 0.0
    %93 = vmatpush1.msra.mxu0 %v64
    %94 = vmatprep.subr.mxu0 0.0
    %95 = vmatpush1.msra.mxu0 %v65
    %96 = vmatprep.subr.mxu0 0.0
    %97 = vmatpush1.msra.mxu0 %v66
    %98 = vmatprep.subr.mxu0 0.0
    %99 = vmatpush1.msra.mxu0 %v67
    %100 = vmatprep.subr.mxu0 0.0
    %101 = vmatpush1.msra.mxu0 %v68
    %102 = vmatprep.subr.mxu0 0.0
    %103 = vmatpush1.msra.mxu0 %v69
    %104 = vmatprep.subr.mxu0 0.0
    %105 = vmatpush1.msra.mxu0 %v70
    %106 = vmatprep.subr.mxu0 0.0
    %107 = vmatpush1.msra.mxu0 %v71
    %108 = vmatprep.subr.mxu0 0.0
    %109 = vmatpush1.msra.mxu0 %v72
    %110 = vmatprep.subr.mxu0 0.0
    %111 = vmatpush1.msra.mxu0 %v73
    %112 = vmatprep.subr.mxu0 0.0
    %113 = vmatpush1.msra.mxu0 %v74
    %114 = vmatprep.subr.mxu0 0.0
    %115 = vmatpush1.msra.mxu0 0.0
    %116 = vmatprep.subr.mxu0 0.0
    %117 = vmatpush1.msra.mxu0 0.0
    %118 = vmatprep.subr.mxu0 0.0
    %119 = vmatpush1.msra.mxu0 0.0
    %120 = vmatprep.subr.mxu0 0.0
    %121 = vmatpush1.msra.mxu0 0.0
    %122 = vmatprep.subr.mxu0 0.0
    %123 = vmatpush1.msra.mxu0 0.0
    %124 = vmatprep.subr.mxu0 0.0
    %125 = vmatpush1.msra.mxu0 0.0
    %126 = vmatprep.subr.mxu0 0.0
    %127 = vmatpush1.msra.mxu0 0.0
    %128 = vmatprep.subr.mxu0 0.0
    %129 = vmatpush1.msra.mxu0 0.0
    %130 = vmatprep.subr.mxu0 0.0
    %131 = vmatpush1.msra.mxu0 0.0
    %132 = vmatprep.subr.mxu0 0.0
    %133 = vmatpush1.msra.mxu0 0.0
    %134 = vmatprep.subr.mxu0 0.0
    %135 = vmatpush1.msra.mxu0 0.0
    %136 = vmatprep.subr.mxu0 0.0
    %137 = vmatpush1.msra.mxu0 0.0
    %138 = vmatprep.subr.mxu0 0.0
    %139 = vmatpush1.msra.mxu0 0.0
    %140 = vmatprep.subr.mxu0 0.0
    %141 = vmatpush1.msra.mxu0 0.0
    %142 = vmatprep.subr.mxu0 0.0
    %143 = vmatpush1.msra.mxu0 0.0
    %144 = vmatprep.subr.mxu0 0.0
    %145 = vmatpush1.msra.mxu0 0.0
    %146 = vmatprep.mubr.f32.mxu0 0.0
    %147 = vmatmul.mubr.f32.gmra.mrb[0].mxu0 %v43
    %v148 = vpop.f32.mrb[0].mxu0
    %v149 = vadd.f32 %v80, %v148
    %v150 = vpop.f32.mrb[0].mxu0
    %151 = vmatprep.mubr.f32.mxu0 0.0
    %152 = vmatmul.mubr.f32.gmra.mrb[0].mxu0 %v44
    %v153 = vpop.f32.mrb[0].mxu0
    %v154 = vadd.f32 %v80, %v153
    %v155 = vpop.f32.mrb[0].mxu0
    %156 = vmatprep.mubr.f32.mxu0 0.0
    %157 = vmatmul.mubr.f32.gmra.mrb[0].mxu0 %v45
    %v158 = vpop.f32.mrb[0].mxu0
    %v159 = vadd.f32 %v80, %v158
    %v160 = vpop.f32.mrb[0].mxu0
    %161 = vmatprep.mubr.f32.mxu0 0.0
    %162 = vmatmul.mubr.f32.gmra.mrb[0].mxu0 %v46
    %v163 = vpop.f32.mrb[0].mxu0
    %v164 = vadd.f32 %v80, %v163
    %v165 = vpop.f32.mrb[0].mxu0
    %166 = vmatprep.mubr.f32.mxu0 0.0
    %167 = vmatmul.mubr.f32.gmra.mrb[0].mxu0 %v47
    %v168 = vpop.f32.mrb[0].mxu0
    %v169 = vadd.f32 %v80, %v168
    %v170 = vpop.f32.mrb[0].mxu0
    %171 = vmatprep.mubr.f32.mxu0 0.0
    %172 = vmatmul.mubr.f32.gmra.mrb[0].mxu0 %v48
    %v173 = vpop.f32.mrb[0].mxu0
    %v174 = vadd.f32 %v80, %v173
    %v175 = vpop.f32.mrb[0].mxu0
    %176 = vmatprep.mubr.f32.mxu0 0.0
    %177 = vmatmul.mubr.f32.gmra.mrb[0].mxu0 %v49
    %v178 = vpop.f32.mrb[0].mxu0
    %v179 = vadd.f32 %v80, %v178
    %v180 = vpop.f32.mrb[0].mxu0
    %181 = vmatprep.mubr.f32.mxu0 0.0
    %182 = vmatmul.mubr.f32.gmra.mrb[0].mxu0 %v50
    %v183 = vpop.f32.mrb[0].mxu0
    %v184 = vadd.f32 %v80, %v183
    %v185 = vpop.f32.mrb[0].mxu0
    %186 = vmatprep.mubr.f32.mxu0 0.0
    %187 = vmatmul.mubr.f32.gmra.mrb[0].mxu0 %v51
    %v188 = vpop.f32.mrb[0].mxu0
    %v189 = vadd.f32 %v80, %v188
    %v190 = vpop.f32.mrb[0].mxu0
    %191 = vmatprep.mubr.f32.mxu0 0.0
    %192 = vmatmul.mubr.f32.gmra.mrb[0].mxu0 %v52
    %v193 = vpop.f32.mrb[0].mxu0
    %v194 = vadd.f32 %v80, %v193
    %v195 = vpop.f32.mrb[0].mxu0
    %196 = vmatprep.mubr.f32.mxu0 0.0
    %197 = vmatmul.mubr.f32.gmra.mrb[0].mxu0 %v53
    %v198 = vpop.f32.mrb[0].mxu0
    %v199 = vadd.f32 %v80, %v198
    %v200 = vpop.f32.mrb[0].mxu0
    %201 = vmatprep.mubr.f32.mxu0 0.0
    %202 = vmatmul.mubr.f32.gmra.mrb[0].mxu0 %v54
    %v203 = vpop.f32.mrb[0].mxu0
    %v204 = vadd.f32 %v80, %v203
    %v205 = vpop.f32.mrb[0].mxu0
    %206 = vmatprep.mubr.f32.mxu0 0.0
    %207 = vmatmul.mubr.f32.gmra.mrb[0].mxu0 %v55
    %v208 = vpop.f32.mrb[0].mxu0
    %v209 = vadd.f32 %v80, %v208
    %v210 = vpop.f32.mrb[0].mxu0
    %211 = vmatprep.mubr.f32.mxu0 0.0
    %212 = vmatmul.mubr.f32.gmra.mrb[0].mxu0 %v56
    %v213 = vpop.f32.mrb[0].mxu0
    %v214 = vadd.f32 %v80, %v213
    %v215 = vpop.f32.mrb[0].mxu0
    %216 = vmatprep.mubr.f32.mxu0 0.0
    %217 = vmatmul.mubr.f32.gmra.mrb[0].mxu0 %v57
    %v218 = vpop.f32.mrb[0].mxu0
    %v219 = vadd.f32 %v80, %v218
    %v220 = vpop.f32.mrb[0].mxu0
    %221 = vmatprep.mubr.f32.mxu0 0.0
    %222 = vmatmul.mubr.f32.gmra.mrb[0].mxu0 %v58
    %v223 = vpop.f32.mrb[0].mxu0
    %v224 = vadd.f32 %v80, %v223
    %v225 = vpop.f32.mrb[0].mxu0
    %226 = vdwg.mxu0
    %v227 = vmax.f32 %v149, 0.0
    %v228 = vmax.f32 %v154, 0.0
    %v229 = vmax.f32 %v159, 0.0
    %v230 = vmax.f32 %v164, 0.0
    %v231 = vmax.f32 %v169, 0.0
    %v232 = vmax.f32 %v174, 0.0
    %v233 = vmax.f32 %v179, 0.0
    %v234 = vmax.f32 %v184, 0.0
    %v235 = vmax.f32 %v189, 0.0
    %v236 = vmax.f32 %v194, 0.0
    %v237 = vmax.f32 %v199, 0.0
    %v238 = vmax.f32 %v204, 0.0
    %v239 = vmax.f32 %v209, 0.0
    %v240 = vmax.f32 %v214, 0.0
    %v241 = vmax.f32 %v219, 0.0
    %v242 = vmax.f32 %v224, 0.0
    %243 = vst [vmem:[#allocation7] sm:$0xff] %v227
    %244 = vst [vmem:[#allocation7 + $0x8] sm:$0xff] %v228
    %245 = vst [vmem:[#allocation7 + $0x10] sm:$0xff] %v229
    %246 = vst [vmem:[#allocation7 + $0x18] sm:$0xff] %v230
    %247 = vst [vmem:[#allocation7 + $0x20] sm:$0xff] %v231
    %248 = vst [vmem:[#allocation7 + $0x28] sm:$0xff] %v232
    %249 = vst [vmem:[#allocation7 + $0x30] sm:$0xff] %v233
    %250 = vst [vmem:[#allocation7 + $0x38] sm:$0xff] %v234
    %251 = vst [vmem:[#allocation7 + $0x40] sm:$0xff] %v235
    %252 = vst [vmem:[#allocation7 + $0x48] sm:$0xff] %v236
    %253 = vst [vmem:[#allocation7 + $0x50] sm:$0xff] %v237
    %254 = vst [vmem:[#allocation7 + $0x58] sm:$0xff] %v238
    %255 = vst [vmem:[#allocation7 + $0x60] sm:$0xff] %v239
    %256 = vst [vmem:[#allocation7 + $0x68] sm:$0xff] %v240
    %257 = vst [vmem:[#allocation7 + $0x70] sm:$0xff] %v241
    %258 = vst [vmem:[#allocation7 + $0x78] sm:$0xff] %v242
    // Predicated region
    $region22: #{tpu_custom_call.1} parent=1 // pred_check
      _
    $region23: #{tpu_custom_call.1} parent=1 // pred_check_branch
      %260 = sbr.rel (0) target = $region25
    $region24: #{tpu_custom_call.1} parent=1 // pred_region
      %s262 = ssub.s32 2048, 2048
      %263 = vsyncadd [#allocation4], %s262
      %s264 = sshll.u32 [#allocation7], 4
      %s265 = int_to_ptr.vmem [resolvable:$true] %s264
      %270 = dma.vmem_to_hbm [thread:$0]  %s265, 2048, %s3, [#allocation4], 128, 128, 8
    $region25: #{tpu_custom_call.1} parent=1 // pred_fallthru
      _
    // Predicated region
    $region26: #{tpu_custom_call.1} parent=1 // pred_check
      _
    $region27: #{tpu_custom_call.1} parent=1 // pred_check_branch
      %272 = sbr.rel (0) target = $region29
    $region28: #{tpu_custom_call.1} parent=1 // pred_region
      %273 = dma.done [#allocation4], 2048
    $region29: #{tpu_custom_call.1} parent=1 // pred_fallthru
      _
    %274 = vsyncpa [#allocation3], 1
    %275 = vsyncpa [#allocation6], 1
    %276 = vsyncpa [#allocation4], 1

</llo_original>
